<compile_context>
chip_gen: v6e
topology: v6e:2x2x1
jax: 0.10.0
libtpu: 0.0.40
codegen_flags: <defaults>
</compile_context>

<pallas_src>
import functools

import jax
import jax.numpy as jnp
from jax.experimental import pallas as pl
from jax.experimental.pallas import tpu as pltpu


def _pos_enc_kernel(x_ref, pos_ref, clspos_ref, o_ref, *, patch_lanes):
    """One grid step handles TB batch rows, flattened along (seq*emb).

    x_ref:      (TB, S*E)        patch embeddings for this batch chunk
    pos_ref:    (1,  S*E)        positional embedding for the patch rows (shared)
    clspos_ref: (1,  C*E)        cls_token + position[S:] precomputed (shared)
    o_ref:      (TB, (S+C)*E)    output chunk
    """
    # Big slab: lane-dense (S*E multiple of 128 at demo shapes) -> unmasked vst.
    o_ref[:, :patch_lanes] = x_ref[...] + pos_ref[...]
    # Tiny cls tail: positional row already added in the wrapper; broadcast-store.
    tb = o_ref.shape[0]
    cls_lanes = o_ref.shape[1] - patch_lanes
    o_ref[:, patch_lanes:] = jnp.broadcast_to(clspos_ref[...], (tb, cls_lanes))
    # TODO(synk): dropout is eval-mode identity (training-mode masking would
    # need pltpu.prng_* and cannot reproduce torch RNG anyway).


def _sublane_rows(dtype):
    """Rows per packed vreg sublane tile: 8 for f32, 16 for bf16, 32 for int8."""
    itemsize = jnp.dtype(dtype).itemsize
    return 8 * max(1, 4 // max(1, itemsize))


def _vmem_config():
    """(vmem_limit_bytes, block_budget_bytes) derived from the chip generation."""
    try:
        vmem_cap = int(pltpu.get_tpu_info().vmem_capacity_bytes)
    except Exception:
        vmem_cap = 64 << 20  # conservative: v7x per-TensorCore physical VMEM
    # v5e/v6e (128 MiB physical) -> 64 MiB scoped limit, ~16 MiB block budget.
    # v7x    ( 64 MiB physical) -> 32 MiB scoped limit, ~ 8 MiB block budget.
    vmem_limit = min(vmem_cap // 2, 64 << 20)
    block_budget = max(4 << 20, vmem_limit // 4)
    return vmem_limit, block_budget


def _choose_batch_block(batch, row_bytes, dtype, *, vmem_budget_bytes,
                        want_multi_step):
    """Rows of the batch handled per grid step.

    Hard-capped so that (x block + out block), each double-buffered
    (~4 * row_bytes per row), never exceeds the VMEM budget.  Prefers a
    divisor of `batch` (no ragged edge block) aligned to the dtype's sublane
    packing, and >= 2 grid steps for non-trivial batches so both of v7x's
    TensorCores get work under dimension_semantics=("parallel",).
    """
    pack = _sublane_rows(dtype)
    max_rows = max(1, vmem_budget_bytes // (4 * row_bytes))  # hard VMEM cap
    max_rows = min(max_rows, batch)

    if want_multi_step and batch >= 2:
        target = min(max_rows, -(-batch // 2))  # aim for >= 2 grid steps
    else:
        target = max_rows

    if target >= batch:
        return batch

    # Pack-aligned divisor of batch, never above the VMEM cap.
    if target >= pack:
        for cand in range((target // pack) * pack, pack - 1, -pack):
            if batch % cand == 0:
                return cand
    # Any divisor of batch that fits.
    for cand in range(target, 0, -1):
        if batch % cand == 0:
            return cand
    return 1


def _block_spec(shape, index_map, buffers=None):
    """BlockSpec with optional explicit buffer depth (graceful fallback)."""
    if buffers is None:
        return pl.BlockSpec(shape, index_map)
    try:
        return pl.BlockSpec(shape, index_map, pipeline_mode=pl.Buffered(buffers))
    except Exception:
        return pl.BlockSpec(shape, index_map)


def positional_encoding_forward(x, cls_token, position):
    """x: (B, S, E); cls_token: (1, C, E); position: (S + C, E) -> (B, S+C, E)."""
    B, S, E = x.shape
    _, C, _ = cls_token.shape
    assert position.shape == (S + C, E)

    SE, CE = S * E, C * E

    # Flatten to lane-dense 2-D slabs (free reshapes of contiguous arrays).
    x_flat = x.reshape(B, SE)
    pos_patches = position[:S].reshape(1, SE).astype(x.dtype)
    # cls + its positional rows computed once outside the hot path (tiny XLA op).
    cls_plus_pos = (cls_token[0] + position[S:]).reshape(1, CE).astype(x.dtype)

    itemsize = jnp.dtype(x.dtype).itemsize
    row_bytes = (SE + CE) * itemsize
    vmem_limit, block_budget = _vmem_config()
    # Only force multiple grid steps when the streaming work amortizes the
    # ~0.35 us per-step overhead (otherwise a single step is strictly better).
    want_multi_step = (B >= 2) and (B * row_bytes >= (1 << 20))

    TB = _choose_batch_block(B, row_bytes, x.dtype,
                             vmem_budget_bytes=block_budget,
                             want_multi_step=want_multi_step)
    grid = (pl.cdiv(B, TB),)

    kernel = functools.partial(_pos_enc_kernel, patch_lanes=SE)

    out_flat = pl.pallas_call(
        kernel,
        out_shape=jax.ShapeDtypeStruct((B, SE + CE), x.dtype),
        grid_spec=pltpu.PrefetchScalarGridSpec(
            num_scalar_prefetch=0,
            grid=grid,
            in_specs=[
                # Streamed x chunk: default double-buffering.
                _block_spec((TB, SE), lambda b: (b, 0)),
                # Grid-invariant shared inputs: single-buffered (never re-DMA'd).
                _block_spec((1, SE), lambda b: (0, 0), buffers=1),
                _block_spec((1, CE), lambda b: (0, 0), buffers=1),
            ],
            out_specs=pl.BlockSpec((TB, SE + CE), lambda b: (b, 0)),
        ),
        compiler_params=pltpu.CompilerParams(
            dimension_semantics=("parallel",),
            vmem_limit_bytes=vmem_limit,
        ),
    )(x_flat, pos_patches, cls_plus_pos)

    return out_flat.reshape(B, S + C, E)


if __name__ == "__main__":
    # Small-shape configuration consistent with the module's __init__:
    #   patch_size=4, img_size=16 -> number_dim = 4, num_patches = 16
    #   emb_dim=32, in_channels=1, batch=2
    patch_size = 4
    img_size = 16
    emb_dim = 32
    in_channels = 1
    batch = 2

    number_dim = img_size // patch_size
    num_patches = number_dim ** 2          # 16
    seq_out = num_patches + in_channels    # 17 (position table length)

    key = jax.random.PRNGKey(0)
    kx, kc, kp = jax.random.split(key, 3)

    # Deterministic "parameters" (torch.rand -> uniform[0,1)).
    cls_token = jax.random.uniform(kc, (1, in_channels, emb_dim), dtype=jnp.float32)
    position = jax.random.uniform(kp, (seq_out, emb_dim), dtype=jnp.float32)

    # Input patch embeddings.
    x = jax.random.uniform(kx, (batch, num_patches, emb_dim), dtype=jnp.float32)

    out = positional_encoding_forward(x, cls_token, position)
    out = jax.block_until_ready(out)

    # Reference check in plain JAX (eval-mode dropout == identity).
    cls_expand = jnp.broadcast_to(cls_token, (batch, in_channels, emb_dim))
    ref = jnp.concatenate([x, cls_expand], axis=1) + position[None, :, :]
    assert out.shape == (batch, seq_out, emb_dim)
    assert jnp.allclose(out, ref, atol=1e-6), "mismatch vs reference"

    print("KERNEL_OK")
</pallas_src>

<mosaic_0001>
module attributes {stable_mosaic.version = 11 : i64} {
  func.func @_pos_enc_kernel(%arg0: i32, %arg1: memref<2x512xf32, #tpu.memory_space<vmem>>, %arg2: memref<1x512xf32, #tpu.memory_space<vmem>>, %arg3: memref<1x32xf32, #tpu.memory_space<vmem>>, %arg4: memref<2x544xf32, #tpu.memory_space<vmem>>) attributes {dimension_semantics = [#tpu.dimension_semantics<parallel>], iteration_bounds = array<i64: 1>, scalar_prefetch = 0 : i64, scratch_operands = 0 : i64, tpu.core_type = #tpu.core_type<tc>, window_params = [{transform_indices = @transform_0, window_bounds = array<i64: 2, 512>}, {pipeline_mode = #tpu.pipeline_mode<synchronous>, transform_indices = @transform_1, window_bounds = array<i64: 1, 512>}, {pipeline_mode = #tpu.pipeline_mode<synchronous>, transform_indices = @transform_2, window_bounds = array<i64: 1, 32>}, {transform_indices = @transform_3, window_bounds = array<i64: 2, 544>}]} {
    %c0 = arith.constant 0 : index
    %c0_0 = arith.constant 0 : index
    %0 = vector.load %arg1[%c0, %c0_0] : memref<2x512xf32, #tpu.memory_space<vmem>>, vector<2x512xf32>
    %c0_1 = arith.constant 0 : index
    %c0_2 = arith.constant 0 : index
    %1 = vector.load %arg2[%c0_1, %c0_2] : memref<1x512xf32, #tpu.memory_space<vmem>>, vector<1x512xf32>
    %2 = vector.broadcast %1 : vector<1x512xf32> to vector<2x512xf32>
    %3 = arith.addf %0, %2 : vector<2x512xf32>
    %c0_3 = arith.constant 0 : index
    %c0_4 = arith.constant 0 : index
    %4 = vector.load %arg4[%c0_3, %c0_4] : memref<2x544xf32, #tpu.memory_space<vmem>>, vector<2x512xf32>
    tpu.vector_store %arg4[%c0_3, %c0_4], %3 {strides = array<i32>} : memref<2x544xf32, #tpu.memory_space<vmem>>, vector<2x512xf32>,
    %c0_5 = arith.constant 0 : index
    %c0_6 = arith.constant 0 : index
    %5 = vector.load %arg3[%c0_5, %c0_6] : memref<1x32xf32, #tpu.memory_space<vmem>>, vector<1x32xf32>
    %6 = vector.shape_cast %5 : vector<1x32xf32> to vector<1x32xf32>
    %7 = vector.broadcast %6 : vector<1x32xf32> to vector<2x32xf32>
    %c0_7 = arith.constant 0 : index
    %c512 = arith.constant 512 : index
    %8 = vector.load %arg4[%c0_7, %c512] : memref<2x544xf32, #tpu.memory_space<vmem>>, vector<2x32xf32>
    tpu.vector_store %arg4[%c0_7, %c512], %7 {strides = array<i32>} : memref<2x544xf32, #tpu.memory_space<vmem>>, vector<2x32xf32>,
    return
  }
  func.func @transform_0(%arg0: i32) -> (i32, i32) {
    %c0_i32 = arith.constant 0 : i32
    %c0_i32_0 = arith.constant 0 : i32
    return %arg0, %c0_i32 : i32, i32
  }
  func.func @transform_1(%arg0: i32) -> (i32, i32) {
    %c0_i32 = arith.constant 0 : i32
    %c0_i32_0 = arith.constant 0 : i32
    %c0_i32_1 = arith.constant 0 : i32
    return %c0_i32, %c0_i32_0 : i32, i32
  }
  func.func @transform_2(%arg0: i32) -> (i32, i32) {
    %c0_i32 = arith.constant 0 : i32
    %c0_i32_0 = arith.constant 0 : i32
    %c0_i32_1 = arith.constant 0 : i32
    return %c0_i32, %c0_i32_0 : i32, i32
  }
  func.func @transform_3(%arg0: i32) -> (i32, i32) {
    %c0_i32 = arith.constant 0 : i32
    %c0_i32_0 = arith.constant 0 : i32
    return %arg0, %c0_i32 : i32, i32
  }
}

</mosaic_0001>

<llo_original>
// kernel: tpu_custom_call.1
$region0: #{tpu_custom_call.1}
  #allocation0 [shape = 'u32[]', space=smem, size = 0x4, offset = 0x4, fixed_abs, tag = 'smem constant byte address 0x4 - core index']
  #allocation1 [shape = 'u32[144,128]{1,0:T(1,128)}', space=vmem, size = 0x12000, scoped, tag = 'internal scratch']
  %s0 = inlined_call_operand.hbm [shape: f32[2,512], index: 0, kind: input, shape index: {}]
  %s1 = inlined_call_operand.hbm [shape: f32[1,512], index: 1, kind: input, shape index: {}]
  %s2 = inlined_call_operand.vmem [shape: f32[1,32], index: 2, kind: input, shape index: {}]
  %s3 = inlined_call_operand.hbm [shape: f32[2,544], index: 3, kind: output, shape index: {}]
  %s4 = sld [smem:[#allocation0]]
  $region30: #{tpu_custom_call.1} parent=0
    _
  %s6 = ssub.s32 1, %s4
  %s7 = scalar_select 0, %s6, %s4
  $region1: #{tpu_custom_call.1} parent=0
    #allocation2 [shape = 'u8[4096]{0}', space=vmem, size = 0x1000, scoped, tag = 'input window, operand 0, single buffered']
    #allocation3 [shape = 's32[1]{0}', space=sflag, size = 0x4, scoped, tag = 'scoped memory for tpu_custom_call.1']
    #allocation4 [shape = 's32[1]{0}', space=sflag, size = 0x4, scoped, tag = 'scoped memory for tpu_custom_call.1']
    #allocation5 [shape = 'u8[2048]{0}', space=vmem, size = 0x800, scoped, tag = 'input window, operand 1, single buffered']
    #allocation6 [shape = 's32[1]{0}', space=sflag, size = 0x4, scoped, tag = 'scoped memory for tpu_custom_call.1']
    #allocation7 [shape = 'u8[5120]{0}', space=vmem, size = 0x1400, scoped, tag = 'output window, operand 0, single buffered']
    %8 = vsyncpa [#allocation3], 0
    %9 = vsyncpa [#allocation6], 0
    %10 = vsyncpa [#allocation4], 0
    // Predicated region
    $region2: #{tpu_custom_call.1} parent=1 // pred_check
      _
    $region3: #{tpu_custom_call.1} parent=1 // pred_check_branch
      %12 = sbr.rel (0) target = $region5
    $region4: #{tpu_custom_call.1} parent=1 // pred_region
      %s14 = ssub.s32 128, 128
      %15 = vsyncadd [#allocation3], %s14
      %s17 = sshll.u32 [#allocation2], 4
      %s18 = int_to_ptr.vmem [resolvable:$true] %s17
      %20 = dma.hbm_to_vmem [thread:$0]  %s0, 128, %s18, [#allocation3]
    $region5: #{tpu_custom_call.1} parent=1 // pred_fallthru
      _
    // Predicated region
    $region6: #{tpu_custom_call.1} parent=1 // pred_check
      _
    $region7: #{tpu_custom_call.1} parent=1 // pred_check_branch
      %22 = sbr.rel (0) target = $region9
    $region8: #{tpu_custom_call.1} parent=1 // pred_region
      %s24 = ssub.s32 64, 64
      %25 = vsyncadd [#allocation6], %s24
      %s27 = sshll.u32 [#allocation5], 4
      %s28 = int_to_ptr.vmem [resolvable:$true] %s27
      %30 = dma.hbm_to_vmem [thread:$0]  %s1, 64, %s28, [#allocation6]
    $region9: #{tpu_custom_call.1} parent=1 // pred_fallthru
      _
    // Predicated region
    $region10: #{tpu_custom_call.1} parent=1 // pred_check
      _
    $region11: #{tpu_custom_call.1} parent=1 // pred_check_branch
      %32 = sbr.rel (0) target = $region13
    $region12: #{tpu_custom_call.1} parent=1 // pred_region
      _
    $region13: #{tpu_custom_call.1} parent=1 // pred_fallthru
      _
    // Predicated region
    $region14: #{tpu_custom_call.1} parent=1 // pred_check
      _
    $region15: #{tpu_custom_call.1} parent=1 // pred_check_branch
      %34 = sbr.rel (0) target = $region17
    $region16: #{tpu_custom_call.1} parent=1 // pred_region
      %35 = dma.done [#allocation3], 128
    $region17: #{tpu_custom_call.1} parent=1 // pred_fallthru
      _
    // Predicated region
    $region18: #{tpu_custom_call.1} parent=1 // pred_check
      _
    $region19: #{tpu_custom_call.1} parent=1 // pred_check_branch
      %37 = sbr.rel (0) target = $region21
    $region20: #{tpu_custom_call.1} parent=1 // pred_region
      %38 = dma.done [#allocation6], 64
    $region21: #{tpu_custom_call.1} parent=1 // pred_fallthru
      _
    %v39 = vld [vmem:[#allocation2] sm:$0xff]
    %v40 = vld [vmem:[#allocation5] sm:$0xf]
    %v42 = vlaneseq
    %v43 = vshrl.u32 %v42, 7
    %v44 = vsub.s32 0, %v43
    %v45 = vrot.slane %v40, %v44
    %v46 = vlaneseq
    %v47 = vshrl.u32 %v46, 7
    %v48 = vsub.s32 1, %v47
    %v49 = vrot.slane %v40, %v48
    %v50 = vlaneseq
    %v51 = vshrl.u32 %v50, 7
    %v52 = vsub.s32 2, %v51
    %v53 = vrot.slane %v40, %v52
    %v54 = vlaneseq
    %v55 = vshrl.u32 %v54, 7
    %v56 = vsub.s32 3, %v55
    %v57 = vrot.slane %v40, %v56
    %v58 = vcombine.low %v45, %v49
    %v59 = vcombine.low %v53, %v57
    %v61 = vunpack.c.l.s4 1983009808
    %v62 = vunpack.c.0.s8 %v61
    %v63 = vlaneseq
    %v64 = vshrl.u32 %v63, 7
    %v65 = vsub.s32 %v62, %v64
    %v66 = vrot.slane %v58, %v65
    %v68 = vunpack.c.l.s4 1983009808
    %v69 = vunpack.c.0.s8 %v68
    %v70 = vlaneseq
    %v71 = vshrl.u32 %v70, 7
    %v72 = vsub.s32 %v69, %v71
    %v73 = vrot.slane %v59, %v72
    %v74 = vcombine.low %v66, %v73
    %v76 = vadd.f32 %v39, %v74
    %77 = vst [vmem:[#allocation7] sm:$0xff] %v76
    %v78 = vld [vmem:[%s2] sm:$0x1]
    %v80 = vlaneseq
    %v81 = vshrl.u32 %v80, 7
    %v82 = vsub.s32 0, %v81
    %v83 = vrot.slane %v78, %v82
    %vm85 = vcmask 254976
    %86 = vst.msk [vmem:[#allocation7 + $0x8] sm:$0x3] %vm85, %v83
    // Predicated region
    $region22: #{tpu_custom_call.1} parent=1 // pred_check
      _
    $region23: #{tpu_custom_call.1} parent=1 // pred_check_branch
      %88 = sbr.rel (0) target = $region25
    $region24: #{tpu_custom_call.1} parent=1 // pred_region
      %s90 = ssub.s32 160, 160
      %91 = vsyncadd [#allocation4], %s90
      %s93 = sshll.u32 [#allocation7], 4
      %s94 = int_to_ptr.vmem [resolvable:$true] %s93
      %96 = dma.vmem_to_hbm [thread:$0]  %s94, 160, %s3, [#allocation4]
    $region25: #{tpu_custom_call.1} parent=1 // pred_fallthru
      _
    // Predicated region
    $region26: #{tpu_custom_call.1} parent=1 // pred_check
      _
    $region27: #{tpu_custom_call.1} parent=1 // pred_check_branch
      %98 = sbr.rel (0) target = $region29
    $region28: #{tpu_custom_call.1} parent=1 // pred_region
      %99 = dma.done [#allocation4], 160
    $region29: #{tpu_custom_call.1} parent=1 // pred_fallthru
      _
    %100 = vsyncpa [#allocation3], 1
    %101 = vsyncpa [#allocation6], 1
    %102 = vsyncpa [#allocation4], 1

</llo_original>
